<compile_context>
chip_gen: v6e
topology: v6e:2x2x1
jax: 0.10.0
libtpu: 0.0.40
codegen_flags: <defaults>
</compile_context>

<pallas_src>
import functools

import jax
import jax.numpy as jnp
from jax import lax
from jax.experimental import pallas as pl
from jax.experimental.pallas import tpu as pltpu


def _round_up(v, m):
    return ((v + m - 1) // m) * m


def _mlp_kernel(p_ref, x_ref, o_ref, *, dims):
    """One lane-tile of the MLP.

    p_ref : (R, C)  packed params   (VMEM, constant across the grid)
    x_ref : (F, BN) lane-batched input tile
    o_ref : (O, BN) lane-batched output tile
    """
    F, H1, H2, O = dims

    # Unpack parameters with static slices (all within one 128-lane tile).
    p = p_ref[...]
    c = 0
    w1 = p[:H1, c:c + F];   c += F      # (H1, F)
    b1 = p[:H1, c:c + 1];   c += 1      # (H1, 1)
    w2 = p[:H2, c:c + H1];  c += H1     # (H2, H1)
    b2 = p[:H2, c:c + 1];   c += 1      # (H2, 1)
    w3 = p[:H2, c:c + O];   c += O      # (H2, O)
    b3 = p[:O,  c:c + 1]                # (O, 1)

    x = x_ref[...]                                            # (F, BN) f32

    # ---- layer 1: relu(W1 @ x + b1) -------------------------------------
    if F == 1:
        # K == 1: outer product -> pure VPU broadcast-mul, no MXU round trip.
        h1 = w1 * x + b1                                      # (H1, BN)
    else:
        h1 = jnp.dot(w1, x, preferred_element_type=jnp.float32) + b1
    h1 = jnp.maximum(h1, 0.0)

    # ---- layer 2: relu(W2 @ h1 + b2) -- dense, keep on the MXU ----------
    h2 = jnp.dot(w2, h1, preferred_element_type=jnp.float32) + b2
    h2 = jnp.maximum(h2, 0.0)                                 # (H2, BN)

    # ---- layer 3: W3 @ h2 + b3 -------------------------------------------
    if O == 1:
        # Output width 1: VPU multiply + cross-sublane reduce (XLU); avoids a
        # second degenerate MXU push/drain.
        y = jnp.sum(w3 * h2, axis=0, keepdims=True) + b3      # (1, BN)
    else:
        # Contract w3's axis 0 directly -- no materialized transpose.
        y = lax.dot_general(w3, h2, (((0,), (0,)), ((), ())),
                            preferred_element_type=jnp.float32) + b3
    o_ref[...] = y.astype(o_ref.dtype)                        # (O, BN)


@functools.partial(jax.jit, static_argnames=("dims", "block_n"))
def net_forward(x, packed, *, dims, block_n=512):
    """Forward pass of Net. x: (N, n_feature) f32 -> (N, n_output) f32."""
    F, H1, H2, O = dims
    n = x.shape[0]

    # Lanes per grid step: multiple of 128, no bigger than needed for this N.
    bn = min(block_n, _round_up(n, 128))
    grid = (pl.cdiv(n, bn),)

    x_t = x.T                                                 # (F, N) -- trivial under jit

    flops = 2 * n * (F * H1 + H1 * H2 + H2 * O)
    bytes_accessed = 4 * (x.size + packed.size + n * O)

    y_t = pl.pallas_call(
        functools.partial(_mlp_kernel, dims=dims),
        out_shape=jax.ShapeDtypeStruct((O, n), jnp.float32),
        grid=grid,
        in_specs=[
            # Packed params: one block == whole array, constant index_map, so it
            # stays resident in VMEM across all lane tiles.
            pl.BlockSpec(packed.shape, lambda i: (0, 0)),
            # Input: lane-axis tiles; Pallas masks the partial last block.
            pl.BlockSpec((F, bn), lambda i: (0, i)),
        ],
        out_specs=pl.BlockSpec((O, bn), lambda i: (0, i)),
        compiler_params=pltpu.CompilerParams(
            dimension_semantics=("parallel",)),
        cost_estimate=pl.CostEstimate(
            flops=flops, transcendentals=0, bytes_accessed=bytes_accessed),
    )(packed, x_t)

    return y_t.T                                              # (N, O)


def init_params(key, n_feature, n_hidden1, n_hidden2, n_output):
    """Deterministic init mirroring torch.nn.Linear default
    (U[-1/sqrt(fan_in), 1/sqrt(fan_in)]).

    Returned layout:
      w1: (n_hidden1, n_feature)   b1: (n_hidden1, 1)
      w2: (n_hidden2, n_hidden1)   b2: (n_hidden2, 1)
      w3: (n_hidden2, n_output)    b3: (n_output, 1)   (w3 stored pre-transposed)
    """
    def linear(k, fan_in, fan_out):
        kw, kb = jax.random.split(k)
        bound = 1.0 / jnp.sqrt(jnp.float32(fan_in))
        w = jax.random.uniform(kw, (fan_out, fan_in), jnp.float32, -bound, bound)
        b = jax.random.uniform(kb, (fan_out, 1), jnp.float32, -bound, bound)
        return w, b

    k1, k2, k3 = jax.random.split(key, 3)
    w1, b1 = linear(k1, n_feature, n_hidden1)
    w2, b2 = linear(k2, n_hidden1, n_hidden2)
    w3, b3 = linear(k3, n_hidden2, n_output)
    return (w1, b1, w2, b2, w3.T, b3)


def pack_params(w1, b1, w2, b2, w3, b3):
    """Pack all six parameter arrays into one contiguous (R, C) f32 array."""
    H1, F = w1.shape
    H2 = w2.shape[0]
    O = w3.shape[1]
    R = max(H1, H2, O)
    C = F + 1 + H1 + 1 + O + 1
    p = jnp.zeros((R, C), jnp.float32)
    c = 0
    p = p.at[:H1, c:c + F].set(w1);  c += F
    p = p.at[:H1, c:c + 1].set(b1);  c += 1
    p = p.at[:H2, c:c + H1].set(w2); c += H1
    p = p.at[:H2, c:c + 1].set(b2);  c += 1
    p = p.at[:H2, c:c + O].set(w3);  c += O
    p = p.at[:O,  c:c + 1].set(b3)
    return p


def net_forward_ref(x, params):
    """Pure-JAX reference (same math as the torch Net)."""
    w1, b1, w2, b2, w3, b3 = params
    h1 = jax.nn.relu(x @ w1.T + b1.T)
    h2 = jax.nn.relu(h1 @ w2.T + b2.T)
    return h2 @ w3 + b3.T


if __name__ == "__main__":
    key = jax.random.PRNGKey(0)

    # Matches the script: x = linspace(-1, 1, 100) unsqueezed to (100, 1),
    # Net(n_feature=1, n_hidden1=32, n_hidden2=32, n_output=1).
    n_feature, n_hidden1, n_hidden2, n_output = 1, 32, 32, 1
    n = 100
    dims = (n_feature, n_hidden1, n_hidden2, n_output)

    x = jnp.expand_dims(jnp.linspace(-1.0, 1.0, n, dtype=jnp.float32), axis=1)
    params = init_params(key, *dims)
    packed = pack_params(*params)

    y = net_forward(x, packed, dims=dims)
    y = jax.block_until_ready(y)

    y_ref = net_forward_ref(x, params)
    assert y.shape == (n, n_output), y.shape
    assert jnp.allclose(y, y_ref, atol=1e-5, rtol=1e-5), "mismatch vs JAX reference"

    print("KERNEL_OK")
</pallas_src>

<mosaic_0001>
module attributes {stable_mosaic.version = 11 : i64} {
  func.func @_mlp_kernel(%arg0: i32, %arg1: memref<32x37xf32, #tpu.memory_space<vmem>>, %arg2: memref<1x128xf32, #tpu.memory_space<vmem>>, %arg3: memref<1x128xf32, #tpu.memory_space<vmem>>) attributes {dimension_semantics = [#tpu.dimension_semantics<parallel>], iteration_bounds = array<i64: 1>, scalar_prefetch = 0 : i64, scratch_operands = 0 : i64, tpu.core_type = #tpu.core_type<tc>, window_params = [{pipeline_mode = #tpu.pipeline_mode<synchronous>, transform_indices = @transform_0, window_bounds = array<i64: 32, 37>}, {transform_indices = @transform_1, window_bounds = array<i64: 1, 128>}, {transform_indices = @transform_2, window_bounds = array<i64: 1, 128>}]} {
    %c0 = arith.constant 0 : index
    %c0_0 = arith.constant 0 : index
    %0 = vector.load %arg1[%c0, %c0_0] : memref<32x37xf32, #tpu.memory_space<vmem>>, vector<32x37xf32>
    %1 = vector.extract_strided_slice %0 {offsets = [0, 0], sizes = [32, 1], strides = [1, 1]} : vector<32x37xf32> to vector<32x1xf32>
    %2 = vector.extract_strided_slice %0 {offsets = [0, 1], sizes = [32, 1], strides = [1, 1]} : vector<32x37xf32> to vector<32x1xf32>
    %3 = vector.extract_strided_slice %0 {offsets = [0, 2], sizes = [32, 32], strides = [1, 1]} : vector<32x37xf32> to vector<32x32xf32>
    %4 = vector.extract_strided_slice %0 {offsets = [0, 34], sizes = [32, 1], strides = [1, 1]} : vector<32x37xf32> to vector<32x1xf32>
    %5 = vector.extract_strided_slice %0 {offsets = [0, 35], sizes = [32, 1], strides = [1, 1]} : vector<32x37xf32> to vector<32x1xf32>
    %6 = vector.extract_strided_slice %0 {offsets = [0, 36], sizes = [1, 1], strides = [1, 1]} : vector<32x37xf32> to vector<1x1xf32>
    %c0_1 = arith.constant 0 : index
    %c0_2 = arith.constant 0 : index
    %7 = vector.load %arg2[%c0_1, %c0_2] : memref<1x128xf32, #tpu.memory_space<vmem>>, vector<1x128xf32>
    %8 = vector.broadcast %1 : vector<32x1xf32> to vector<32x128xf32>
    %9 = vector.broadcast %7 : vector<1x128xf32> to vector<32x128xf32>
    %10 = arith.mulf %8, %9 : vector<32x128xf32>
    %11 = vector.broadcast %2 : vector<32x1xf32> to vector<32x128xf32>
    %12 = arith.addf %10, %11 : vector<32x128xf32>
    %cst = arith.constant 0.000000e+00 : f32
    %13 = vector.broadcast %cst : f32 to vector<32x128xf32>
    %14 = arith.maximumf %12, %13 : vector<32x128xf32>
    %cst_3 = arith.constant dense<0.000000e+00> : vector<32x128xf32>
    %15 = tpu.matmul %3, %14, %cst_3 {dimension_numbers = #tpu.dot_dimension_numbers<[1], [0], [0], [1], [0, 0, 1, 1], [], []>} : vector<32x32xf32>, vector<32x128xf32>, vector<32x128xf32> -> vector<32x128xf32>
    %16 = vector.broadcast %4 : vector<32x1xf32> to vector<32x128xf32>
    %17 = arith.addf %15, %16 : vector<32x128xf32>
    %cst_4 = arith.constant 0.000000e+00 : f32
    %18 = vector.broadcast %cst_4 : f32 to vector<32x128xf32>
    %19 = arith.maximumf %17, %18 : vector<32x128xf32>
    %20 = vector.broadcast %5 : vector<32x1xf32> to vector<32x128xf32>
    %21 = arith.mulf %20, %19 : vector<32x128xf32>
    %cst_5 = arith.constant dense<0.000000e+00> : vector<128xf32>
    %22 = vector.multi_reduction <add>, %21, %cst_5 [0] : vector<32x128xf32> to vector<128xf32>
    %23 = vector.shape_cast %22 : vector<128xf32> to vector<1x128xf32>
    %24 = vector.broadcast %6 : vector<1x1xf32> to vector<1x128xf32>
    %25 = arith.addf %23, %24 : vector<1x128xf32>
    %c0_6 = arith.constant 0 : index
    %c0_7 = arith.constant 0 : index
    %26 = vector.load %arg3[%c0_6, %c0_7] : memref<1x128xf32, #tpu.memory_space<vmem>>, vector<1x128xf32>
    tpu.vector_store %arg3[%c0_6, %c0_7], %25 {strides = array<i32>} : memref<1x128xf32, #tpu.memory_space<vmem>>, vector<1x128xf32>,
    return
  }
  func.func @transform_0(%arg0: i32) -> (i32, i32) {
    %c0_i32 = arith.constant 0 : i32
    %c0_i32_0 = arith.constant 0 : i32
    %c0_i32_1 = arith.constant 0 : i32
    return %c0_i32, %c0_i32_0 : i32, i32
  }
  func.func @transform_1(%arg0: i32) -> (i32, i32) {
    %c0_i32 = arith.constant 0 : i32
    %c0_i32_0 = arith.constant 0 : i32
    return %c0_i32, %arg0 : i32, i32
  }
  func.func @transform_2(%arg0: i32) -> (i32, i32) {
    %c0_i32 = arith.constant 0 : i32
    %c0_i32_0 = arith.constant 0 : i32
    return %c0_i32, %arg0 : i32, i32
  }
}

</mosaic_0001>

<llo_original>
// kernel: net_forward.1
$region0: #{net_forward.1}
  #allocation0 [shape = 'u32[]', space=smem, size = 0x4, offset = 0x4, fixed_abs, tag = 'smem constant byte address 0x4 - core index']
  #allocation1 [shape = 'u32[144,128]{1,0:T(1,128)}', space=vmem, size = 0x12000, scoped, tag = 'internal scratch']
  %s0 = inlined_call_operand.hbm [shape: f32[32,37], index: 0, kind: input, shape index: {}]
  %s1 = inlined_call_operand.vmem [shape: f32[1,100], index: 1, kind: input, shape index: {}]
  %s2 = inlined_call_operand.hbm [shape: f32[1,100], index: 2, kind: output, shape index: {}]
  %s3 = sld [smem:[#allocation0]]
  $region22: #{net_forward.1} parent=0
    _
  %s5 = ssub.s32 1, %s3
  %s6 = scalar_select 0, %s5, %s3
  $region1: #{net_forward.1} parent=0
    #allocation2 [shape = 'u8[16384]{0}', space=vmem, size = 0x4000, scoped, tag = 'input window, operand 0, single buffered']
    #allocation3 [shape = 's32[1]{0}', space=sflag, size = 0x4, scoped, tag = 'scoped memory for net_forward.1']
    #allocation4 [shape = 's32[1]{0}', space=sflag, size = 0x4, scoped, tag = 'scoped memory for net_forward.1']
    #allocation5 [shape = 'u8[512]{0}', space=vmem, size = 0x400, scoped, tag = 'output window, operand 0, single buffered']
    %7 = vsyncpa [#allocation3], 0
    %8 = vsyncpa [#allocation4], 0
    // Predicated region
    $region2: #{net_forward.1} parent=1 // pred_check
      _
    $region3: #{net_forward.1} parent=1 // pred_check_branch
      %10 = sbr.rel (0) target = $region5
    $region4: #{net_forward.1} parent=1 // pred_region
      %s12 = ssub.s32 512, 512
      %13 = vsyncadd [#allocation3], %s12
      %s14 = sshll.u32 [#allocation2], 4
      %s15 = int_to_ptr.vmem [resolvable:$true] %s14
      %20 = dma.hbm_to_vmem [thread:$0]  %s0, 512, %s15, [#allocation3], 128, 128, 8
    $region5: #{net_forward.1} parent=1 // pred_fallthru
      _
    // Predicated region
    $region6: #{net_forward.1} parent=1 // pred_check
      _
    $region7: #{net_forward.1} parent=1 // pred_check_branch
      %22 = sbr.rel (0) target = $region9
    $region8: #{net_forward.1} parent=1 // pred_region
      _
    $region9: #{net_forward.1} parent=1 // pred_fallthru
      _
    // Predicated region
    $region10: #{net_forward.1} parent=1 // pred_check
      _
    $region11: #{net_forward.1} parent=1 // pred_check_branch
      %24 = sbr.rel (0) target = $region13
    $region12: #{net_forward.1} parent=1 // pred_region
      %25 = dma.done [#allocation3], 512
    $region13: #{net_forward.1} parent=1 // pred_fallthru
      _
    %v26 = vld [vmem:[#allocation2] sm:$0xff]
    %v27 = vld [vmem:[#allocation2 + $0x8] sm:$0xff]
    %v28 = vld [vmem:[#allocation2 + $0x10] sm:$0xff]
    %v29 = vld [vmem:[#allocation2 + $0x18] sm:$0xff]
    %v30 = vld [vmem:[%s1] sm:$0x1]
    %32 = vset.pattern.permute.xlu0 0
    %33 = vperm.xlu0 %32, %v26
    %v34 = vpop.permute.xlu0 %33
    %37 = vset.pattern.permute.xlu0 0
    %38 = vperm.xlu0 %37, %v27
    %v39 = vpop.permute.xlu0 %38
    %42 = vset.pattern.permute.xlu0 0
    %43 = vperm.xlu0 %42, %v28
    %v44 = vpop.permute.xlu0 %43
    %47 = vset.pattern.permute.xlu0 0
    %48 = vperm.xlu0 %47, %v29
    %v49 = vpop.permute.xlu0 %48
    %v52 = vlaneseq
    %v53 = vshrl.u32 %v52, 7
    %v54 = vsub.s32 0, %v53
    %v55 = vrot.slane %v30, %v54
    %v57 = vmul.f32 %v34, %v55
    %v58 = vmul.f32 %v39, %v55
    %v59 = vmul.f32 %v44, %v55
    %v60 = vmul.f32 %v49, %v55
    %61 = vset.pattern.permute.xlu0 1
    %62 = vperm.xlu0 %61, %v26
    %v63 = vpop.permute.xlu0 %62
    %65 = vset.pattern.permute.xlu0 1
    %66 = vperm.xlu0 %65, %v27
    %v67 = vpop.permute.xlu0 %66
    %69 = vset.pattern.permute.xlu0 1
    %70 = vperm.xlu0 %69, %v28
    %v71 = vpop.permute.xlu0 %70
    %73 = vset.pattern.permute.xlu0 1
    %74 = vperm.xlu0 %73, %v29
    %v75 = vpop.permute.xlu0 %74
    %v77 = vadd.f32 %v57, %v63
    %v78 = vadd.f32 %v58, %v67
    %v79 = vadd.f32 %v59, %v71
    %v80 = vadd.f32 %v60, %v75
    %v81 = vmax.f32 %v77, 0.0
    %v82 = vmax.f32 %v78, 0.0
    %v83 = vmax.f32 %v79, 0.0
    %v84 = vmax.f32 %v80, 0.0
    %85 = vset.pattern.permute.xlu0 34
    %86 = vperm.xlu0 %85, %v26
    %v87 = vpop.permute.xlu0 %86
    %89 = vset.pattern.permute.xlu0 34
    %90 = vperm.xlu0 %89, %v27
    %v91 = vpop.permute.xlu0 %90
    %93 = vset.pattern.permute.xlu0 34
    %94 = vperm.xlu0 %93, %v28
    %v95 = vpop.permute.xlu0 %94
    %97 = vset.pattern.permute.xlu0 34
    %98 = vperm.xlu0 %97, %v29
    %v99 = vpop.permute.xlu0 %98
    %101 = vrot.lane.b32.xlu0 %v26, 126
    %v102 = vpop.permute.xlu0 %101
    %103 = vrot.lane.b32.xlu0 %v27, 126
    %v104 = vpop.permute.xlu0 %103
    %105 = vrot.lane.b32.xlu0 %v28, 126
    %v106 = vpop.permute.xlu0 %105
    %107 = vrot.lane.b32.xlu0 %v29, 126
    %v108 = vpop.permute.xlu0 %107
    %vm109 = vcmask 261120
    %v110 = vsel %vm109, %v102, 0
    %v112 = vsel %vm109, %v104, 0
    %v114 = vsel %vm109, %v106, 0
    %v116 = vsel %vm109, %v108, 0
    %118 = vmatprep.subr.mxu0 0.0
    %119 = vmatpush1.msra.mxu0 0.0
    %120 = vmatprep.subr.mxu0 0.0
    %121 = vmatpush1.msra.mxu0 0.0
    %122 = vmatprep.subr.mxu0 0.0
    %123 = vmatpush1.msra.mxu0 0.0
    %124 = vmatprep.subr.mxu0 0.0
    %125 = vmatpush1.msra.mxu0 0.0
    %126 = vmatprep.subr.mxu0 0.0
    %127 = vmatpush1.msra.mxu0 0.0
    %128 = vmatprep.subr.mxu0 0.0
    %129 = vmatpush1.msra.mxu0 0.0
    %130 = vmatprep.subr.mxu0 0.0
    %131 = vmatpush1.msra.mxu0 0.0
    %132 = vmatprep.subr.mxu0 0.0
    %133 = vmatpush1.msra.mxu0 0.0
    %134 = vmatprep.subr.mxu0 0.0
    %135 = vmatpush1.msra.mxu0 0.0
    %136 = vmatprep.subr.mxu0 0.0
    %137 = vmatpush1.msra.mxu0 0.0
    %138 = vmatprep.subr.mxu0 0.0
    %139 = vmatpush1.msra.mxu0 0.0
    %140 = vmatprep.subr.mxu0 0.0
    %141 = vmatpush1.msra.mxu0 0.0
    %142 = vmatprep.subr.mxu0 0.0
    %143 = vmatpush1.msra.mxu0 %v84
    %144 = vmatprep.subr.mxu0 0.0
    %145 = vmatpush1.msra.mxu0 %v83
    %146 = vmatprep.subr.mxu0 0.0
    %147 = vmatpush1.msra.mxu0 %v82
    %148 = vmatprep.subr.mxu0 0.0
    %149 = vmatpush1.msra.mxu0 %v81
    %150 = vmatprep.subr.mxu0 0.0
    %151 = vmatpush2.msra.mxu0 0.0
    %152 = vmatprep.subr.mxu0 0.0
    %153 = vmatpush2.msra.mxu0 0.0
    %154 = vmatprep.subr.mxu0 0.0
    %155 = vmatpush2.msra.mxu0 0.0
    %156 = vmatprep.subr.mxu0 0.0
    %157 = vmatpush2.msra.mxu0 0.0
    %158 = vmatprep.subr.mxu0 0.0
    %159 = vmatpush2.msra.mxu0 0.0
    %160 = vmatprep.subr.mxu0 0.0
    %161 = vmatpush2.msra.mxu0 0.0
    %162 = vmatprep.subr.mxu0 0.0
    %163 = vmatpush2.msra.mxu0 0.0
    %164 = vmatprep.subr.mxu0 0.0
    %165 = vmatpush2.msra.mxu0 0.0
    %166 = vmatprep.subr.mxu0 0.0
    %167 = vmatpush2.msra.mxu0 0.0
    %168 = vmatprep.subr.mxu0 0.0
    %169 = vmatpush2.msra.mxu0 0.0
    %170 = vmatprep.subr.mxu0 0.0
    %171 = vmatpush2.msra.mxu0 0.0
    %172 = vmatprep.subr.mxu0 0.0
    %173 = vmatpush2.msra.mxu0 0.0
    %174 = vmatprep.subr.mxu0 0.0
    %175 = vmatpush2.msra.mxu0 0.0
    %176 = vmatprep.subr.mxu0 0.0
    %177 = vmatpush2.msra.mxu0 0.0
    %178 = vmatprep.subr.mxu0 0.0
    %179 = vmatpush2.msra.mxu0 0.0
    %180 = vmatprep.subr.mxu0 0.0
    %181 = vmatpush2.msra.mxu0 0.0
    %182 = vmatprep.mubr.f32.mxu0 0.0
    %183 = vmatmul.mubr.f32.gmra.mxu0 %v110
    %v184 = vpop.f32.mrf.mxu0
    %v185 = vadd.f32 %v87, %v184
    %v186 = vpop.f32.mrf.mxu0
    %187 = vmatprep.mubr.f32.mxu0 0.0
    %188 = vmatmul.mubr.f32.gmra.mxu0 %v112
    %v189 = vpop.f32.mrf.mxu0
    %v190 = vadd.f32 %v91, %v189
    %v191 = vpop.f32.mrf.mxu0
    %192 = vmatprep.mubr.f32.mxu0 0.0
    %193 = vmatmul.mubr.f32.gmra.mxu0 %v114
    %v194 = vpop.f32.mrf.mxu0
    %v195 = vadd.f32 %v95, %v194
    %v196 = vpop.f32.mrf.mxu0
    %197 = vmatprep.mubr.f32.mxu0 0.0
    %198 = vmatmul.mubr.f32.gmra.mxu0 %v116
    %v199 = vpop.f32.mrf.mxu0
    %v200 = vadd.f32 %v99, %v199
    %v201 = vpop.f32.mrf.mxu0
    %202 = vdwg.mxu0
    %v203 = vmax.f32 %v185, 0.0
    %v204 = vmax.f32 %v190, 0.0
    %v205 = vmax.f32 %v195, 0.0
    %v206 = vmax.f32 %v200, 0.0
    %207 = vset.pattern.permute.xlu0 35
    %208 = vperm.xlu0 %207, %v26
    %v209 = vpop.permute.xlu0 %208
    %211 = vset.pattern.permute.xlu0 35
    %212 = vperm.xlu0 %211, %v27
    %v213 = vpop.permute.xlu0 %212
    %215 = vset.pattern.permute.xlu0 35
    %216 = vperm.xlu0 %215, %v28
    %v217 = vpop.permute.xlu0 %216
    %219 = vset.pattern.permute.xlu0 35
    %220 = vperm.xlu0 %219, %v29
    %v221 = vpop.permute.xlu0 %220
    %v223 = vmul.f32 %v209, %v203
    %v224 = vmul.f32 %v213, %v204
    %v225 = vmul.f32 %v217, %v205
    %v226 = vmul.f32 %v221, %v206
    %v227 = vadd.f32 %v223, %v224
    %v228 = vadd.f32 %v227, %v225
    %v229 = vadd.f32 %v228, %v226
    %v230 = vrot.slane %v229, 4
    %v231 = vadd.f32 %v229, %v230
    %v232 = vrot.slane %v231, 2
    %v233 = vadd.f32 %v231, %v232
    %v234 = vrot.slane %v233, 1
    %v235 = vadd.f32 %v233, %v234
    %236 = vset.pattern.permute.xlu0 36
    %237 = vperm.xlu0 %236, %v26
    %v238 = vpop.permute.xlu0 %237
    %v240 = vadd.f32 %v235, %v238
    %241 = vst [vmem:[#allocation5] sm:$0x1] %v240
    // Predicated region
    $region14: #{net_forward.1} parent=1 // pred_check
      _
    $region15: #{net_forward.1} parent=1 // pred_check_branch
      %243 = sbr.rel (0) target = $region17
    $region16: #{net_forward.1} parent=1 // pred_region
      %s245 = ssub.s32 16, 16
      %246 = vsyncadd [#allocation4], %s245
      %s248 = sshll.u32 [#allocation5], 4
      %s249 = int_to_ptr.vmem [resolvable:$true] %s248
      %251 = dma.vmem_to_hbm [thread:$0]  %s249, 16, %s2, [#allocation4]
    $region17: #{net_forward.1} parent=1 // pred_fallthru
      _
    // Predicated region
    $region18: #{net_forward.1} parent=1 // pred_check
      _
    $region19: #{net_forward.1} parent=1 // pred_check_branch
      %253 = sbr.rel (0) target = $region21
    $region20: #{net_forward.1} parent=1 // pred_region
      %254 = dma.done [#allocation4], 16
    $region21: #{net_forward.1} parent=1 // pred_fallthru
      _
    %255 = vsyncpa [#allocation3], 1
    %256 = vsyncpa [#allocation4], 1

</llo_original>
